<compile_context>
chip_gen: v7x
topology: tpu7x:2x2x1
jax: 0.10.0
libtpu: 0.0.40
codegen_flags: <defaults>
</compile_context>

<pallas_src>
import functools

import jax
import jax.numpy as jnp
from jax.experimental import pallas as pl
from jax.experimental.pallas import tpu as pltpu

STATE_SIZE = 32            # config.STATE_SIZE
HIDDEN = 128               # fc1 output width (lane width)
ACTION_SIZE = 8            # config.ACTION_SIZE
VALUE_COL = ACTION_SIZE    # column of the fused head holding the state value
OUT_W = 16                 # stored output width: probs 0:8, value at 8, pad to 16

# Packed-params row layout (8-row-aligned sections so static slices stay cheap).
W1_R0 = 0                  # rows   0: 32  -> fc1 weight (STATE_SIZE, 128)
B1_R = 32                  # row   32      -> fc1 bias (rows 33:40 zero pad)
WH_R0 = 40                 # rows  40:168  -> fused head weight (128, 128)
BH_R = 168                 # row  168      -> fused head bias (rows 169:176 pad)
P_ROWS = 176

NEG_BIG = -1e30            # Python float: effective -inf for the softmax mask


def _round_up(x, m):
    return ((x + m - 1) // m) * m


def policy_net_kernel(x_ref, p_ref, out_ref):
    x = x_ref[...]                                    # (TB, 32)

    w1 = p_ref[W1_R0:W1_R0 + STATE_SIZE, :]           # (32, 128)
    b1 = p_ref[B1_R:B1_R + 1, :]                      # (1, 128)
    wh = p_ref[WH_R0:WH_R0 + HIDDEN, :]               # (128, 128): cols 0:8 action, col 8 value
    bh = p_ref[BH_R:BH_R + 1, :]                      # (1, 128)

    # fc1 + ReLU (K=32 MXU matmul + broadcast bias row)
    h = jnp.maximum(jnp.dot(x, w1, preferred_element_type=jnp.float32) + b1, 0.0)

    # fused action/value head: one 128-wide MXU push
    z = jnp.dot(h, wh, preferred_element_type=jnp.float32) + bh   # (TB, 128)

    # softmax over the ACTION_SIZE real logit columns only
    col = jax.lax.broadcasted_iota(jnp.int32, z.shape, 1)
    is_action = col < ACTION_SIZE
    logits = jnp.where(is_action, z, NEG_BIG)
    m = jnp.max(logits, axis=-1, keepdims=True)
    e = jnp.exp(logits - m)                           # masked cols underflow to exactly 0
    probs = e / jnp.sum(e, axis=-1, keepdims=True)    # exact reciprocal (HBM-bound; VPU idle)

    # probs is exactly 0 at VALUE_COL (masked), so fold the value in with one add,
    # then store only the first OUT_W lanes (narrow writeback).
    slab = probs + jnp.where(col == VALUE_COL, z, 0.0)
    out_ref[...] = slab[:, :OUT_W]


def pack_params(params):
    """Pack (w1,b1,wa,ba,ws,bs) into one (P_ROWS, 128) f32 array."""
    w1, b1, wa, ba, ws, bs = params  # w1:(S,128) b1:(128,) wa:(128,A) ba:(A,) ws:(128,1) bs:(1,)
    w_heads = jnp.zeros((HIDDEN, HIDDEN), jnp.float32)
    w_heads = w_heads.at[:, :ACTION_SIZE].set(wa)
    w_heads = w_heads.at[:, VALUE_COL].set(ws[:, 0])

    b_heads = jnp.zeros((HIDDEN,), jnp.float32)
    b_heads = b_heads.at[:ACTION_SIZE].set(ba)
    b_heads = b_heads.at[VALUE_COL].set(bs[0])

    packed = jnp.zeros((P_ROWS, HIDDEN), jnp.float32)
    packed = packed.at[W1_R0:W1_R0 + STATE_SIZE, :].set(w1)
    packed = packed.at[B1_R, :].set(b1)
    packed = packed.at[WH_R0:WH_R0 + HIDDEN, :].set(w_heads)
    packed = packed.at[BH_R, :].set(b_heads)
    return packed


@functools.partial(jax.jit, static_argnames=("block_b",))
def policy_net_forward(x, packed_params, *, block_b=512):
    """x: (B, STATE_SIZE) f32. Returns (action_prob (B,A), state_value (B,1))."""
    B = x.shape[0]
    half = -(-B // 2)                                 # cdiv(B, 2): aim for >=2 blocks (v7x 2 TCs)
    tb = max(8, min(block_b, _round_up(half, 8)))     # batch tile, 8-row aligned
    b_pad = _round_up(B, tb)
    n_blocks = b_pad // tb

    x_pad = x
    if b_pad != B:                                    # pad batch only when needed
        x_pad = jnp.zeros((b_pad, STATE_SIZE), jnp.float32).at[:B, :].set(x)

    out = pl.pallas_call(
        policy_net_kernel,
        out_shape=jax.ShapeDtypeStruct((b_pad, OUT_W), jnp.float32),
        grid=(n_blocks,),
        in_specs=[
            pl.BlockSpec((tb, STATE_SIZE), lambda i: (i, 0)),     # x tile, unpadded 32 lanes
            pl.BlockSpec((P_ROWS, HIDDEN), lambda i: (0, 0)),     # packed params (resident)
        ],
        out_specs=pl.BlockSpec((tb, OUT_W), lambda i: (i, 0)),    # narrow 16-lane output
        compiler_params=pltpu.CompilerParams(
            dimension_semantics=("parallel",)),                   # shard batch across TCs (v7x)
    )(x_pad, packed_params)

    action_prob = out[:B, :ACTION_SIZE]
    state_value = out[:B, VALUE_COL:VALUE_COL + 1]
    return action_prob, state_value


def init_params(key):
    """Mirror the PyTorch module: weights ~ N(0, 0.1); biases ~ U(+-1/sqrt(fan_in))."""
    k1, k2, k3, k4, k5, k6 = jax.random.split(key, 6)
    w1 = 0.1 * jax.random.normal(k1, (STATE_SIZE, HIDDEN), dtype=jnp.float32)   # (in, out)
    wa = 0.1 * jax.random.normal(k2, (HIDDEN, ACTION_SIZE), dtype=jnp.float32)
    ws = 0.1 * jax.random.normal(k3, (HIDDEN, 1), dtype=jnp.float32)
    bnd1 = 1.0 / jnp.sqrt(STATE_SIZE)
    bnd2 = 1.0 / jnp.sqrt(HIDDEN)
    b1 = jax.random.uniform(k4, (HIDDEN,), jnp.float32, -bnd1, bnd1)
    ba = jax.random.uniform(k5, (ACTION_SIZE,), jnp.float32, -bnd2, bnd2)
    bs = jax.random.uniform(k6, (1,), jnp.float32, -bnd2, bnd2)
    return (w1, b1, wa, ba, ws, bs)


def reference_forward(x, params):
    """Pure-JAX reference."""
    w1, b1, wa, ba, ws, bs = params
    h = jnp.maximum(x @ w1 + b1, 0.0)
    aprob = jax.nn.softmax(h @ wa + ba, axis=-1)
    sval = h @ ws + bs
    return aprob, sval


if __name__ == "__main__":
    key = jax.random.PRNGKey(0)
    kx, kp = jax.random.split(key)

    BATCH = 4  # small demo batch; padded to one 8-row tile
    x = jax.random.normal(kx, (BATCH, STATE_SIZE), dtype=jnp.float32)
    params = init_params(kp)
    packed = pack_params(params)

    aprob, sval = policy_net_forward(x, packed)
    jax.block_until_ready((aprob, sval))

    aprob_ref, sval_ref = reference_forward(x, params)
    assert aprob.shape == (BATCH, ACTION_SIZE)
    assert sval.shape == (BATCH, 1)
    assert jnp.allclose(aprob, aprob_ref, atol=1e-4, rtol=1e-4)
    assert jnp.allclose(sval, sval_ref, atol=1e-4, rtol=1e-4)
    assert jnp.allclose(jnp.sum(aprob, axis=-1), jnp.ones((BATCH,)), atol=1e-4)

    print("KERNEL_OK")
</pallas_src>

<mosaic_0001>
module attributes {stable_mosaic.version = 11 : i64} {
  func.func @policy_net_kernel(%arg0: i32, %arg1: memref<8x32xf32, #tpu.memory_space<vmem>>, %arg2: memref<176x128xf32, #tpu.memory_space<vmem>>, %arg3: memref<8x16xf32, #tpu.memory_space<vmem>>) attributes {dimension_semantics = [#tpu.dimension_semantics<parallel>], iteration_bounds = array<i64: 1>, scalar_prefetch = 0 : i64, scratch_operands = 0 : i64, tpu.core_type = #tpu.core_type<tc>, window_params = [{transform_indices = @transform_0, window_bounds = array<i64: 8, 32>}, {pipeline_mode = #tpu.pipeline_mode<synchronous>, transform_indices = @transform_1, window_bounds = array<i64: 176, 128>}, {transform_indices = @transform_2, window_bounds = array<i64: 8, 16>}]} {
    %c0 = arith.constant 0 : index
    %c0_0 = arith.constant 0 : index
    %0 = vector.load %arg1[%c0, %c0_0] : memref<8x32xf32, #tpu.memory_space<vmem>>, vector<8x32xf32>
    %c0_1 = arith.constant 0 : index
    %c0_2 = arith.constant 0 : index
    %1 = vector.load %arg2[%c0_1, %c0_2] : memref<176x128xf32, #tpu.memory_space<vmem>>, vector<32x128xf32>
    %c32 = arith.constant 32 : index
    %c0_3 = arith.constant 0 : index
    %2 = vector.load %arg2[%c32, %c0_3] : memref<176x128xf32, #tpu.memory_space<vmem>>, vector<1x128xf32>
    %c40 = arith.constant 40 : index
    %c0_4 = arith.constant 0 : index
    %3 = vector.load %arg2[%c40, %c0_4] : memref<176x128xf32, #tpu.memory_space<vmem>>, vector<128x128xf32>
    %c168 = arith.constant 168 : index
    %c0_5 = arith.constant 0 : index
    %4 = vector.load %arg2[%c168, %c0_5] : memref<176x128xf32, #tpu.memory_space<vmem>>, vector<1x128xf32>
    %cst = arith.constant dense<0.000000e+00> : vector<8x128xf32>
    %5 = tpu.matmul %0, %1, %cst {dimension_numbers = #tpu.dot_dimension_numbers<[1], [0], [0], [1], [0, 0, 1, 1], [], []>} : vector<8x32xf32>, vector<32x128xf32>, vector<8x128xf32> -> vector<8x128xf32>
    %6 = vector.broadcast %2 : vector<1x128xf32> to vector<8x128xf32>
    %7 = arith.addf %5, %6 : vector<8x128xf32>
    %cst_6 = arith.constant 0.000000e+00 : f32
    %8 = vector.broadcast %cst_6 : f32 to vector<8x128xf32>
    %9 = arith.maximumf %7, %8 : vector<8x128xf32>
    %cst_7 = arith.constant dense<0.000000e+00> : vector<8x128xf32>
    %10 = tpu.matmul %9, %3, %cst_7 {dimension_numbers = #tpu.dot_dimension_numbers<[1], [0], [0], [1], [0, 0, 1, 1], [], []>} : vector<8x128xf32>, vector<128x128xf32>, vector<8x128xf32> -> vector<8x128xf32>
    %11 = vector.broadcast %4 : vector<1x128xf32> to vector<8x128xf32>
    %12 = arith.addf %10, %11 : vector<8x128xf32>
    %13 = tpu.iota {dimensions = array<i32: 1>} : vector<8x128xi32>
    %c8_i32 = arith.constant 8 : i32
    %14 = vector.broadcast %c8_i32 : i32 to vector<8x128xi32>
    %15 = arith.cmpi slt, %13, %14 : vector<8x128xi32>
    %cst_8 = arith.constant -1.000000e+30 : f32
    %16 = vector.broadcast %cst_8 : f32 to vector<8x128xf32>
    %17 = arith.select %15, %12, %16 : vector<8x128xi1>, vector<8x128xf32>
    %cst_9 = arith.constant dense<0xFF800000> : vector<8xf32>
    %18 = vector.multi_reduction <maximumf>, %17, %cst_9 [1] : vector<8x128xf32> to vector<8xf32>
    %19 = vector.shape_cast %18 : vector<8xf32> to vector<8x1xf32>
    %20 = vector.broadcast %19 : vector<8x1xf32> to vector<8x128xf32>
    %21 = arith.subf %17, %20 : vector<8x128xf32>
    %22 = math.exp %21 : vector<8x128xf32>
    %cst_10 = arith.constant dense<0.000000e+00> : vector<8xf32>
    %23 = vector.multi_reduction <add>, %22, %cst_10 [1] : vector<8x128xf32> to vector<8xf32>
    %24 = vector.shape_cast %23 : vector<8xf32> to vector<8x1xf32>
    %25 = vector.broadcast %24 : vector<8x1xf32> to vector<8x128xf32>
    %26 = arith.divf %22, %25 : vector<8x128xf32>
    %c8_i32_11 = arith.constant 8 : i32
    %27 = vector.broadcast %c8_i32_11 : i32 to vector<8x128xi32>
    %28 = arith.cmpi eq, %13, %27 : vector<8x128xi32>
    %cst_12 = arith.constant 0.000000e+00 : f32
    %29 = vector.broadcast %cst_12 : f32 to vector<8x128xf32>
    %30 = arith.select %28, %12, %29 : vector<8x128xi1>, vector<8x128xf32>
    %31 = arith.addf %26, %30 : vector<8x128xf32>
    %32 = vector.extract_strided_slice %31 {offsets = [0, 0], sizes = [8, 16], strides = [1, 1]} : vector<8x128xf32> to vector<8x16xf32>
    %c0_13 = arith.constant 0 : index
    %c0_14 = arith.constant 0 : index
    %33 = vector.load %arg3[%c0_13, %c0_14] : memref<8x16xf32, #tpu.memory_space<vmem>>, vector<8x16xf32>
    tpu.vector_store %arg3[%c0_13, %c0_14], %32 {strides = array<i32>} : memref<8x16xf32, #tpu.memory_space<vmem>>, vector<8x16xf32>,
    return
  }
  func.func @transform_0(%arg0: i32) -> (i32, i32) {
    %c0_i32 = arith.constant 0 : i32
    %c0_i32_0 = arith.constant 0 : i32
    return %arg0, %c0_i32 : i32, i32
  }
  func.func @transform_1(%arg0: i32) -> (i32, i32) {
    %c0_i32 = arith.constant 0 : i32
    %c0_i32_0 = arith.constant 0 : i32
    %c0_i32_1 = arith.constant 0 : i32
    return %c0_i32, %c0_i32_0 : i32, i32
  }
  func.func @transform_2(%arg0: i32) -> (i32, i32) {
    %c0_i32 = arith.constant 0 : i32
    %c0_i32_0 = arith.constant 0 : i32
    return %arg0, %c0_i32 : i32, i32
  }
}

</mosaic_0001>

<llo_original>
// kernel: policy_net_forward.1
$region0: #{policy_net_forward.1}
  #allocation0 [shape = 'u32[]', space=smem, size = 0x4, offset = 0x4, fixed_abs, tag = 'smem constant byte address 0x4 - core index']
  #allocation1 [shape = 'u32[144,128]{1,0:T(1,128)}', space=vmem, size = 0x12000, scoped, tag = 'internal scratch']
  %s0 = inlined_call_operand.vmem [shape: f32[8,32], index: 0, kind: input, shape index: {}]
  %s1 = inlined_call_operand.hbm [shape: f32[176,128], index: 1, kind: input, shape index: {}]
  %s2 = inlined_call_operand.vmem [shape: f32[8,16], index: 2, kind: output, shape index: {}]
  %s3 = sld [smem:[#allocation0]]
  $region22: #{policy_net_forward.1} parent=0
    _
  %s5 = ssub.s32 1, %s3
  %s6 = scalar_select 0, %s5, %s3
  $region1: #{policy_net_forward.1} parent=0
    #allocation2 [shape = 'u8[90112]{0}', space=vmem, size = 0x16000, scoped, tag = 'input window, operand 1, single buffered']
    #allocation3 [shape = 's32[1]{0}', space=sflag, size = 0x4, scoped, tag = 'scoped memory for policy_net_forward.1']
    %7 = vsyncpa [#allocation3], 0
    // Predicated region
    $region2: #{policy_net_forward.1} parent=1 // pred_check
      _
    $region3: #{policy_net_forward.1} parent=1 // pred_check_branch
      %9 = sbr.rel (0) target = $region5
    $region4: #{policy_net_forward.1} parent=1 // pred_region
      _
    $region5: #{policy_net_forward.1} parent=1 // pred_fallthru
      _
    // Predicated region
    $region6: #{policy_net_forward.1} parent=1 // pred_check
      _
    $region7: #{policy_net_forward.1} parent=1 // pred_check_branch
      %11 = sbr.rel (0) target = $region9
    $region8: #{policy_net_forward.1} parent=1 // pred_region
      %s13 = ssub.s32 2816, 2816
      %14 = vsyncadd [#allocation3], %s13
      %s15 = sshll.u32 [#allocation2], 4
      %s16 = int_to_ptr.vmem [resolvable:$true] %s15
      %21 = dma.hbm_to_vmem [thread:$0]  %s1, 2816, %s16, [#allocation3], 128, 128, 8
    $region9: #{policy_net_forward.1} parent=1 // pred_fallthru
      _
    // Predicated region
    $region10: #{policy_net_forward.1} parent=1 // pred_check
      _
    $region11: #{policy_net_forward.1} parent=1 // pred_check_branch
      %23 = sbr.rel (0) target = $region13
    $region12: #{policy_net_forward.1} parent=1 // pred_region
      %24 = dma.done [#allocation3], 2816
    $region13: #{policy_net_forward.1} parent=1 // pred_fallthru
      _
    %v25 = vld [vmem:[%s0] sm:$0xff]
    %v26 = vld [vmem:[#allocation2] sm:$0xff]
    %v27 = vld [vmem:[#allocation2 + $0x8] sm:$0xff]
    %v28 = vld [vmem:[#allocation2 + $0x10] sm:$0xff]
    %v29 = vld [vmem:[#allocation2 + $0x18] sm:$0xff]
    %v30 = vld [vmem:[#allocation2 + $0x20] sm:$0x1]
    %v31 = vld [vmem:[#allocation2 + $0x28] sm:$0xff]
    %v32 = vld [vmem:[#allocation2 + $0x30] sm:$0xff]
    %v33 = vld [vmem:[#allocation2 + $0x38] sm:$0xff]
    %v34 = vld [vmem:[#allocation2 + $0x40] sm:$0xff]
    %v35 = vld [vmem:[#allocation2 + $0x48] sm:$0xff]
    %v36 = vld [vmem:[#allocation2 + $0x50] sm:$0xff]
    %v37 = vld [vmem:[#allocation2 + $0x58] sm:$0xff]
    %v38 = vld [vmem:[#allocation2 + $0x60] sm:$0xff]
    %v39 = vld [vmem:[#allocation2 + $0x68] sm:$0xff]
    %v40 = vld [vmem:[#allocation2 + $0x70] sm:$0xff]
    %v41 = vld [vmem:[#allocation2 + $0x78] sm:$0xff]
    %v42 = vld [vmem:[#allocation2 + $0x80] sm:$0xff]
    %v43 = vld [vmem:[#allocation2 + $0x88] sm:$0xff]
    %v44 = vld [vmem:[#allocation2 + $0x90] sm:$0xff]
    %v45 = vld [vmem:[#allocation2 + $0x98] sm:$0xff]
    %v46 = vld [vmem:[#allocation2 + $0xa0] sm:$0xff]
    %v47 = vld [vmem:[#allocation2 + $0xa8] sm:$0x1]
    %v48 = vlaneseq
    %v49 = vshrl.u32 %v48, 7
    %v50 = vsub.s32 0, %v49
    %v51 = vrot.slane %v30, %v50
    %vm52 = vcmask 261120
    %v54 = vsel %vm52, %v25, 0
    %56 = vmatprep.subr.mxu0 0.0
    %57 = vmatpush1.msra.mxu0 %v26
    %58 = vmatprep.subr.mxu0 0.0
    %59 = vmatpush1.msra.mxu0 %v27
    %60 = vmatprep.subr.mxu0 0.0
    %61 = vmatpush1.msra.mxu0 %v28
    %62 = vmatprep.subr.mxu0 0.0
    %63 = vmatpush1.msra.mxu0 %v29
    %64 = vmatprep.subr.mxu0 0.0
    %65 = vmatpush1.msra.mxu0 0.0
    %66 = vmatprep.subr.mxu0 0.0
    %67 = vmatpush1.msra.mxu0 0.0
    %68 = vmatprep.subr.mxu0 0.0
    %69 = vmatpush1.msra.mxu0 0.0
    %70 = vmatprep.subr.mxu0 0.0
    %71 = vmatpush1.msra.mxu0 0.0
    %72 = vmatprep.subr.mxu0 0.0
    %73 = vmatpush1.msra.mxu0 0.0
    %74 = vmatprep.subr.mxu0 0.0
    %75 = vmatpush1.msra.mxu0 0.0
    %76 = vmatprep.subr.mxu0 0.0
    %77 = vmatpush1.msra.mxu0 0.0
    %78 = vmatprep.subr.mxu0 0.0
    %79 = vmatpush1.msra.mxu0 0.0
    %80 = vmatprep.subr.mxu0 0.0
    %81 = vmatpush1.msra.mxu0 0.0
    %82 = vmatprep.subr.mxu0 0.0
    %83 = vmatpush1.msra.mxu0 0.0
    %84 = vmatprep.subr.mxu0 0.0
    %85 = vmatpush1.msra.mxu0 0.0
    %86 = vmatprep.subr.mxu0 0.0
    %87 = vmatpush1.msra.mxu0 0.0
    %88 = vmatprep.subr.mxu0 0.0
    %89 = vmatpush1.msra.mxu0 0.0
    %90 = vmatprep.subr.mxu0 0.0
    %91 = vmatpush1.msra.mxu0 0.0
    %92 = vmatprep.subr.mxu0 0.0
    %93 = vmatpush1.msra.mxu0 0.0
    %94 = vmatprep.subr.mxu0 0.0
    %95 = vmatpush1.msra.mxu0 0.0
    %96 = vmatprep.subr.mxu0 0.0
    %97 = vmatpush1.msra.mxu0 0.0
    %98 = vmatprep.subr.mxu0 0.0
    %99 = vmatpush1.msra.mxu0 0.0
    %100 = vmatprep.subr.mxu0 0.0
    %101 = vmatpush1.msra.mxu0 0.0
    %102 = vmatprep.subr.mxu0 0.0
    %103 = vmatpush1.msra.mxu0 0.0
    %104 = vmatprep.subr.mxu0 0.0
    %105 = vmatpush1.msra.mxu0 0.0
    %106 = vmatprep.subr.mxu0 0.0
    %107 = vmatpush1.msra.mxu0 0.0
    %108 = vmatprep.subr.mxu0 0.0
    %109 = vmatpush1.msra.mxu0 0.0
    %110 = vmatprep.subr.mxu0 0.0
    %111 = vmatpush1.msra.mxu0 0.0
    %112 = vmatprep.subr.mxu0 0.0
    %113 = vmatpush1.msra.mxu0 0.0
    %114 = vmatprep.subr.mxu0 0.0
    %115 = vmatpush1.msra.mxu0 0.0
    %116 = vmatprep.subr.mxu0 0.0
    %117 = vmatpush1.msra.mxu0 0.0
    %118 = vmatprep.subr.mxu0 0.0
    %119 = vmatpush1.msra.mxu0 0.0
    %120 = vmatprep.mubr.f32.mxu0 0.0
    %121 = vmatmul.mubr.f32.gmra.mrb[0].mxu0 %v54
    %v122 = vpop.f32.mrb[0].mxu0
    %v123 = vadd.f32 %v51, %v122
    %v124 = vpop.f32.mrb[0].mxu0
    %125 = vdwg.mxu0
    %v126 = vmax.f32 %v123, 0.0
    %v127 = vlaneseq
    %v128 = vshrl.u32 %v127, 7
    %v129 = vsub.s32 0, %v128
    %v130 = vrot.slane %v47, %v129
    %131 = vmatprep.subr.mxu0 0.0
    %132 = vmatpush1.msra.mxu0 %v31
    %133 = vmatprep.subr.mxu0 0.0
    %134 = vmatpush1.msra.mxu0 %v32
    %135 = vmatprep.subr.mxu0 0.0
    %136 = vmatpush1.msra.mxu0 %v33
    %137 = vmatprep.subr.mxu0 0.0
    %138 = vmatpush1.msra.mxu0 %v34
    %139 = vmatprep.subr.mxu0 0.0
    %140 = vmatpush1.msra.mxu0 %v35
    %141 = vmatprep.subr.mxu0 0.0
    %142 = vmatpush1.msra.mxu0 %v36
    %143 = vmatprep.subr.mxu0 0.0
    %144 = vmatpush1.msra.mxu0 %v37
    %145 = vmatprep.subr.mxu0 0.0
    %146 = vmatpush1.msra.mxu0 %v38
    %147 = vmatprep.subr.mxu0 0.0
    %148 = vmatpush1.msra.mxu0 %v39
    %149 = vmatprep.subr.mxu0 0.0
    %150 = vmatpush1.msra.mxu0 %v40
    %151 = vmatprep.subr.mxu0 0.0
    %152 = vmatpush1.msra.mxu0 %v41
    %153 = vmatprep.subr.mxu0 0.0
    %154 = vmatpush1.msra.mxu0 %v42
    %155 = vmatprep.subr.mxu0 0.0
    %156 = vmatpush1.msra.mxu0 %v43
    %157 = vmatprep.subr.mxu0 0.0
    %158 = vmatpush1.msra.mxu0 %v44
    %159 = vmatprep.subr.mxu0 0.0
    %160 = vmatpush1.msra.mxu0 %v45
    %161 = vmatprep.subr.mxu0 0.0
    %162 = vmatpush1.msra.mxu0 %v46
    %163 = vmatprep.subr.mxu0 0.0
    %164 = vmatpush1.msra.mxu0 0.0
    %165 = vmatprep.subr.mxu0 0.0
    %166 = vmatpush1.msra.mxu0 0.0
    %167 = vmatprep.subr.mxu0 0.0
    %168 = vmatpush1.msra.mxu0 0.0
    %169 = vmatprep.subr.mxu0 0.0
    %170 = vmatpush1.msra.mxu0 0.0
    %171 = vmatprep.subr.mxu0 0.0
    %172 = vmatpush1.msra.mxu0 0.0
    %173 = vmatprep.subr.mxu0 0.0
    %174 = vmatpush1.msra.mxu0 0.0
    %175 = vmatprep.subr.mxu0 0.0
    %176 = vmatpush1.msra.mxu0 0.0
    %177 = vmatprep.subr.mxu0 0.0
    %178 = vmatpush1.msra.mxu0 0.0
    %179 = vmatprep.subr.mxu0 0.0
    %180 = vmatpush1.msra.mxu0 0.0
    %181 = vmatprep.subr.mxu0 0.0
    %182 = vmatpush1.msra.mxu0 0.0
    %183 = vmatprep.subr.mxu0 0.0
    %184 = vmatpush1.msra.mxu0 0.0
    %185 = vmatprep.subr.mxu0 0.0
    %186 = vmatpush1.msra.mxu0 0.0
    %187 = vmatprep.subr.mxu0 0.0
    %188 = vmatpush1.msra.mxu0 0.0
    %189 = vmatprep.subr.mxu0 0.0
    %190 = vmatpush1.msra.mxu0 0.0
    %191 = vmatprep.subr.mxu0 0.0
    %192 = vmatpush1.msra.mxu0 0.0
    %193 = vmatprep.subr.mxu0 0.0
    %194 = vmatpush1.msra.mxu0 0.0
    %195 = vmatprep.mubr.f32.mxu0 0.0
    %196 = vmatmul.mubr.f32.gmra.mrb[0].mxu0 %v126
    %v197 = vpop.f32.mrb[0].mxu0
    %v198 = vadd.f32 %v130, %v197
    %v199 = vpop.f32.mrb[0].mxu0
    %200 = vdwg.mxu0
    %v201 = vlaneseq
    %v202 = vand.u32 %v201, 127
    %vm203 = vcmp.lt.s32.totalorder %v202, 8
    %v204 = vsel %vm203, %v198, -1e+30
    %205 = vmax.xlane.f32.xlu0 %v204
    %v206 = vpop.xlane.xlu0 %205
    %v207 = vsub.f32 %v204, %v206
    %v208 = vmul.f32 %v207, 1.442695
    %v209 = vpow.pop %v208
    %210 = vadd.xlane.f32.xlu0 %v209
    %v211 = vpop.xlane.xlu0 %210
    %v212 = vrcp.pop %v211
    %v213 = vmul.f32 %v209, %v212
    %vm214 = vcmp.eq.s32.totalorder %v202, 8
    %v215 = vsel %vm214, %v198, 0.0
    %v216 = vadd.f32 %v213, %v215
    %vm217 = vcmask 130048
    %218 = vst.msk [vmem:[%s2] sm:$0xff] %vm217, %v216
    // Predicated region
    $region14: #{policy_net_forward.1} parent=1 // pred_check
      _
    $region15: #{policy_net_forward.1} parent=1 // pred_check_branch
      %220 = sbr.rel (0) target = $region17
    $region16: #{policy_net_forward.1} parent=1 // pred_region
      _
    $region17: #{policy_net_forward.1} parent=1 // pred_fallthru
      _
    // Predicated region
    $region18: #{policy_net_forward.1} parent=1 // pred_check
      _
    $region19: #{policy_net_forward.1} parent=1 // pred_check_branch
      %222 = sbr.rel (0) target = $region21
    $region20: #{policy_net_forward.1} parent=1 // pred_region
      _
    $region21: #{policy_net_forward.1} parent=1 // pred_fallthru
      _
    %223 = vsyncpa [#allocation3], 1

</llo_original>
